<compile_context>
chip_gen: v5e
topology: v5e:2x2
jax: 0.10.0
libtpu: 0.0.40
codegen_flags: <defaults>
</compile_context>

<pallas_src>
import functools

import jax
import jax.numpy as jnp
from jax.experimental import pallas as pl
from jax.experimental.pallas import tpu as pltpu

LANE = 128  # TPU vreg lane width


def _round_up(x, m):
    return ((x + m - 1) // m) * m


def make_policy_kernel(obs_clip: float, matmul_dtype):
    """Fused policy forward for one batch tile (obs_clip baked as a constant)."""

    def kernel(obs_ref, mean_ref, inv_std_ref,
               w1_ref, b1_ref, w2_ref, b2_ref,
               wa_ref, ba_ref, low_ref, high_ref,
               out_ref):
        # ---- observation normalization + clamp (f32, VPU) ----
        x = (obs_ref[...] - mean_ref[...]) * inv_std_ref[...]
        x = jnp.clip(x, -obs_clip, obs_clip)

        # ---- extractor: Linear -> Tanh -> Linear -> Tanh ----
        # Matmul operands in bf16 (MXU native on v6e/v7x), f32 accumulation.
        h = jnp.dot(x.astype(matmul_dtype), w1_ref[...],
                    preferred_element_type=jnp.float32) + b1_ref[...]
        h = jnp.tanh(h)
        h = jnp.dot(h.astype(matmul_dtype), w2_ref[...],
                    preferred_element_type=jnp.float32) + b2_ref[...]
        h = jnp.tanh(h)

        # ---- action_net Linear + clip to action-space box (f32) ----
        a = jnp.dot(h.astype(matmul_dtype), wa_ref[...],
                    preferred_element_type=jnp.float32) + ba_ref[...]
        out_ref[...] = jnp.clip(a, low_ref[...], high_ref[...])

    return kernel


def policy_forward(observation, params, *, obs_norm_epsilon, obs_clip,
                   matmul_dtype=jnp.bfloat16, tile_batch=256):
    """Wrapper around pallas_call. observation: [B, obs_dim] float32."""
    (mean, var, w1, b1, w2, b2, wa, ba, low, high) = params
    B, obs_dim = observation.shape
    hidden = w1.shape[1]
    act_dim = wa.shape[1]
    f32 = jnp.float32

    # Pad feature dims to the 128-lane width (lane-dense stores, free on MXU).
    hid_pad = _round_up(hidden, LANE)
    act_pad = _round_up(act_dim, LANE)

    # Batch tiling: TB rows per grid step; batch padded to a multiple of TB.
    # TB=256 f32 rows keeps per-tile VMEM well under v7x's 64 MiB budget
    # (2x obs tile + 2x out tile + resident weights ~= a few hundred KiB).
    tb = min(tile_batch, _round_up(B, 8))
    b_pad = _round_up(B, tb)
    n_tiles = b_pad // tb

    # Fold eps into inv_std once in the wrapper (no per-tile rsqrt).
    inv_std = jax.lax.rsqrt(var.astype(f32) + obs_norm_epsilon)

    def pad2(x, rows, cols):
        r, c = x.shape
        return jnp.pad(x, ((0, rows - r), (0, cols - c)))

    obs_p = pad2(observation.astype(f32), b_pad, obs_dim)
    mean_p = mean.astype(f32).reshape(1, obs_dim)
    inv_std_p = inv_std.reshape(1, obs_dim)
    # Zero-padded weight columns/rows are numerically inert (tanh(0)=0).
    w1_p = pad2(w1.astype(f32), obs_dim, hid_pad).astype(matmul_dtype)
    b1_p = pad2(b1.astype(f32).reshape(1, hidden), 1, hid_pad)
    w2_p = pad2(w2.astype(f32), hid_pad, hid_pad).astype(matmul_dtype)
    b2_p = pad2(b2.astype(f32).reshape(1, hidden), 1, hid_pad)
    wa_p = pad2(wa.astype(f32), hid_pad, act_pad).astype(matmul_dtype)
    ba_p = pad2(ba.astype(f32).reshape(1, act_dim), 1, act_pad)
    low_p = pad2(low.astype(f32).reshape(1, act_dim), 1, act_pad)
    high_p = pad2(high.astype(f32).reshape(1, act_dim), 1, act_pad)

    # Weights / biases / bounds: constant index_map -> fetched once, resident.
    resident = lambda shape: pl.BlockSpec(shape, lambda i: (0, 0))

    flops = 2 * b_pad * (obs_dim * hid_pad + hid_pad * hid_pad + hid_pad * act_pad)
    param_bytes = sum(int(a.size) * a.dtype.itemsize
                      for a in (mean_p, inv_std_p, w1_p, b1_p, w2_p, b2_p,
                                wa_p, ba_p, low_p, high_p))
    bytes_accessed = int(obs_p.size) * 4 + b_pad * act_pad * 4 + param_bytes

    out_padded = pl.pallas_call(
        make_policy_kernel(obs_clip, matmul_dtype),
        out_shape=jax.ShapeDtypeStruct((b_pad, act_pad), f32),
        grid=(n_tiles,),
        in_specs=[
            pl.BlockSpec((tb, obs_dim), lambda i: (i, 0)),  # observation tile
            resident((1, obs_dim)),        # obs_norm_mean
            resident((1, obs_dim)),        # inv_std = rsqrt(var + eps)
            resident((obs_dim, hid_pad)),  # extractor layer 1 weight
            resident((1, hid_pad)),        # extractor layer 1 bias
            resident((hid_pad, hid_pad)),  # extractor layer 2 weight
            resident((1, hid_pad)),        # extractor layer 2 bias
            resident((hid_pad, act_pad)),  # action_net weight
            resident((1, act_pad)),        # action_net bias
            resident((1, act_pad)),        # action_low
            resident((1, act_pad)),        # action_high
        ],
        out_specs=pl.BlockSpec((tb, act_pad), lambda i: (i, 0)),
        compiler_params=pltpu.CompilerParams(
            dimension_semantics=("parallel",),   # megacore sharding on v7x
        ),
        cost_estimate=pl.CostEstimate(
            flops=flops,
            transcendentals=2 * b_pad * hid_pad,   # two tanh layers
            bytes_accessed=bytes_accessed,
        ),
    )(obs_p, mean_p, inv_std_p, w1_p, b1_p, w2_p, b2_p, wa_p, ba_p, low_p, high_p)

    # Slice off batch / lane padding.
    return out_padded[:B, :act_dim]


def init_params(key, obs_dim, hidden, act_dim):
    """Deterministic synthetic parameters (stands in for a loaded checkpoint)."""
    ks = jax.random.split(key, 8)
    scale1 = 1.0 / jnp.sqrt(obs_dim)
    scale2 = 1.0 / jnp.sqrt(hidden)

    mean = jax.random.normal(ks[0], (1, obs_dim), jnp.float32) * 0.1
    var = jnp.abs(jax.random.normal(ks[1], (1, obs_dim), jnp.float32)) + 0.5

    w1 = jax.random.uniform(ks[2], (obs_dim, hidden), jnp.float32, -scale1, scale1)
    b1 = jnp.zeros((1, hidden), jnp.float32)
    w2 = jax.random.uniform(ks[3], (hidden, hidden), jnp.float32, -scale2, scale2)
    b2 = jnp.zeros((1, hidden), jnp.float32)
    wa = jax.random.uniform(ks[4], (hidden, act_dim), jnp.float32, -scale2, scale2)
    ba = jnp.zeros((1, act_dim), jnp.float32)

    # action space bounds (e.g. Box(-1, 1))
    low = -jnp.ones((1, act_dim), jnp.float32)
    high = jnp.ones((1, act_dim), jnp.float32)

    return (mean, var, w1, b1, w2, b2, wa, ba, low, high)


def reference_forward(observation, params, *, obs_norm_epsilon, obs_clip,
                      matmul_dtype=jnp.float32):
    """Pure-JAX reference. matmul_dtype=bf16 mirrors the kernel's MXU dtype."""
    (mean, var, w1, b1, w2, b2, wa, ba, low, high) = params
    x = (observation - mean) / jnp.sqrt(var + obs_norm_epsilon)
    x = jnp.clip(x, -obs_clip, obs_clip)

    def lin(v, w, b):
        return jnp.dot(v.astype(matmul_dtype), w.astype(matmul_dtype),
                       preferred_element_type=jnp.float32) + b

    h = jnp.tanh(lin(x, w1, b1))
    h = jnp.tanh(lin(h, w2, b2))
    a = lin(h, wa, ba)
    return jnp.clip(a, low, high)


if __name__ == "__main__":
    # Small shapes consistent with an SB3 MLP policy export:
    #   batch=8, obs_dim=32, two hidden layers of 64, act_dim=8.
    B, OBS_DIM, HIDDEN, ACT_DIM = 8, 32, 64, 8
    OBS_NORM_EPS = 1e-8
    OBS_CLIP = 10.0

    key = jax.random.PRNGKey(0)
    k_obs, k_params = jax.random.split(key)

    observation = jax.random.normal(k_obs, (B, OBS_DIM), jnp.float32)
    params = init_params(k_params, OBS_DIM, HIDDEN, ACT_DIM)

    fwd = jax.jit(functools.partial(policy_forward,
                                    obs_norm_epsilon=OBS_NORM_EPS,
                                    obs_clip=OBS_CLIP))
    out = jax.block_until_ready(fwd(observation, params))
    assert out.shape == (B, ACT_DIM)

    # Tight check against a reference performing the same bf16-operand matmuls.
    ref_bf16 = reference_forward(observation, params,
                                 obs_norm_epsilon=OBS_NORM_EPS,
                                 obs_clip=OBS_CLIP,
                                 matmul_dtype=jnp.bfloat16)
    assert jnp.allclose(out, ref_bf16, atol=1e-3, rtol=1e-3)

    # Sanity check against the full-f32 (PyTorch-equivalent) forward.
    ref_f32 = reference_forward(observation, params,
                                obs_norm_epsilon=OBS_NORM_EPS,
                                obs_clip=OBS_CLIP)
    assert jnp.allclose(out, ref_f32, atol=5e-2, rtol=5e-2)

    # TODO(synk): get_num_obs() is pure Python metadata on the torch module; no
    # kernel equivalent needed.
    print("KERNEL_OK")
</pallas_src>

<mosaic_0001>
module attributes {stable_mosaic.version = 11 : i64} {
  func.func @kernel(%arg0: i32, %arg1: memref<8x32xf32, #tpu.memory_space<vmem>>, %arg2: memref<1x32xf32, #tpu.memory_space<vmem>>, %arg3: memref<1x32xf32, #tpu.memory_space<vmem>>, %arg4: memref<32x128xbf16, #tpu.memory_space<vmem>>, %arg5: memref<1x128xf32, #tpu.memory_space<vmem>>, %arg6: memref<128x128xbf16, #tpu.memory_space<vmem>>, %arg7: memref<1x128xf32, #tpu.memory_space<vmem>>, %arg8: memref<128x128xbf16, #tpu.memory_space<vmem>>, %arg9: memref<1x128xf32, #tpu.memory_space<vmem>>, %arg10: memref<1x128xf32, #tpu.memory_space<vmem>>, %arg11: memref<1x128xf32, #tpu.memory_space<vmem>>, %arg12: memref<8x128xf32, #tpu.memory_space<vmem>>) attributes {dimension_semantics = [#tpu.dimension_semantics<parallel>], iteration_bounds = array<i64: 1>, scalar_prefetch = 0 : i64, scratch_operands = 0 : i64, tpu.core_type = #tpu.core_type<tc>, window_params = [{transform_indices = @transform_0, window_bounds = array<i64: 8, 32>}, {pipeline_mode = #tpu.pipeline_mode<synchronous>, transform_indices = @transform_1, window_bounds = array<i64: 1, 32>}, {pipeline_mode = #tpu.pipeline_mode<synchronous>, transform_indices = @transform_2, window_bounds = array<i64: 1, 32>}, {pipeline_mode = #tpu.pipeline_mode<synchronous>, transform_indices = @transform_3, window_bounds = array<i64: 32, 128>}, {pipeline_mode = #tpu.pipeline_mode<synchronous>, transform_indices = @transform_4, window_bounds = array<i64: 1, 128>}, {pipeline_mode = #tpu.pipeline_mode<synchronous>, transform_indices = @transform_5, window_bounds = array<i64: 128, 128>}, {pipeline_mode = #tpu.pipeline_mode<synchronous>, transform_indices = @transform_6, window_bounds = array<i64: 1, 128>}, {pipeline_mode = #tpu.pipeline_mode<synchronous>, transform_indices = @transform_7, window_bounds = array<i64: 128, 128>}, {pipeline_mode = #tpu.pipeline_mode<synchronous>, transform_indices = @transform_8, window_bounds = array<i64: 1, 128>}, {pipeline_mode = #tpu.pipeline_mode<synchronous>, transform_indices = @transform_9, window_bounds = array<i64: 1, 128>}, {pipeline_mode = #tpu.pipeline_mode<synchronous>, transform_indices = @transform_10, window_bounds = array<i64: 1, 128>}, {transform_indices = @transform_11, window_bounds = array<i64: 8, 128>}]} {
    %c0 = arith.constant 0 : index
    %c0_0 = arith.constant 0 : index
    %0 = vector.load %arg1[%c0, %c0_0] : memref<8x32xf32, #tpu.memory_space<vmem>>, vector<8x32xf32>
    %c0_1 = arith.constant 0 : index
    %c0_2 = arith.constant 0 : index
    %1 = vector.load %arg2[%c0_1, %c0_2] : memref<1x32xf32, #tpu.memory_space<vmem>>, vector<1x32xf32>
    %2 = vector.broadcast %1 : vector<1x32xf32> to vector<8x32xf32>
    %3 = arith.subf %0, %2 : vector<8x32xf32>
    %c0_3 = arith.constant 0 : index
    %c0_4 = arith.constant 0 : index
    %4 = vector.load %arg3[%c0_3, %c0_4] : memref<1x32xf32, #tpu.memory_space<vmem>>, vector<1x32xf32>
    %5 = vector.broadcast %4 : vector<1x32xf32> to vector<8x32xf32>
    %6 = arith.mulf %3, %5 : vector<8x32xf32>
    %cst = arith.constant -1.000000e+01 : f32
    %cst_5 = arith.constant 1.000000e+01 : f32
    %7 = vector.broadcast %cst : f32 to vector<8x32xf32>
    %8 = arith.maximumf %7, %6 : vector<8x32xf32>
    %9 = vector.broadcast %cst_5 : f32 to vector<8x32xf32>
    %10 = arith.minimumf %9, %8 : vector<8x32xf32>
    %11 = arith.truncf %10 : vector<8x32xf32> to vector<8x32xbf16>
    %c0_6 = arith.constant 0 : index
    %c0_7 = arith.constant 0 : index
    %12 = vector.load %arg4[%c0_6, %c0_7] : memref<32x128xbf16, #tpu.memory_space<vmem>>, vector<32x128xbf16>
    %cst_8 = arith.constant dense<0.000000e+00> : vector<8x128xf32>
    %13 = tpu.matmul %11, %12, %cst_8 {dimension_numbers = #tpu.dot_dimension_numbers<[1], [0], [0], [1], [0, 0, 1, 1], [], []>} : vector<8x32xbf16>, vector<32x128xbf16>, vector<8x128xf32> -> vector<8x128xf32>
    %c0_9 = arith.constant 0 : index
    %c0_10 = arith.constant 0 : index
    %14 = vector.load %arg5[%c0_9, %c0_10] : memref<1x128xf32, #tpu.memory_space<vmem>>, vector<1x128xf32>
    %15 = vector.broadcast %14 : vector<1x128xf32> to vector<8x128xf32>
    %16 = arith.addf %13, %15 : vector<8x128xf32>
    %17 = math.tanh %16 : vector<8x128xf32>
    %18 = arith.truncf %17 : vector<8x128xf32> to vector<8x128xbf16>
    %c0_11 = arith.constant 0 : index
    %c0_12 = arith.constant 0 : index
    %19 = vector.load %arg6[%c0_11, %c0_12] : memref<128x128xbf16, #tpu.memory_space<vmem>>, vector<128x128xbf16>
    %cst_13 = arith.constant dense<0.000000e+00> : vector<8x128xf32>
    %20 = tpu.matmul %18, %19, %cst_13 {dimension_numbers = #tpu.dot_dimension_numbers<[1], [0], [0], [1], [0, 0, 1, 1], [], []>} : vector<8x128xbf16>, vector<128x128xbf16>, vector<8x128xf32> -> vector<8x128xf32>
    %c0_14 = arith.constant 0 : index
    %c0_15 = arith.constant 0 : index
    %21 = vector.load %arg7[%c0_14, %c0_15] : memref<1x128xf32, #tpu.memory_space<vmem>>, vector<1x128xf32>
    %22 = vector.broadcast %21 : vector<1x128xf32> to vector<8x128xf32>
    %23 = arith.addf %20, %22 : vector<8x128xf32>
    %24 = math.tanh %23 : vector<8x128xf32>
    %25 = arith.truncf %24 : vector<8x128xf32> to vector<8x128xbf16>
    %c0_16 = arith.constant 0 : index
    %c0_17 = arith.constant 0 : index
    %26 = vector.load %arg8[%c0_16, %c0_17] : memref<128x128xbf16, #tpu.memory_space<vmem>>, vector<128x128xbf16>
    %cst_18 = arith.constant dense<0.000000e+00> : vector<8x128xf32>
    %27 = tpu.matmul %25, %26, %cst_18 {dimension_numbers = #tpu.dot_dimension_numbers<[1], [0], [0], [1], [0, 0, 1, 1], [], []>} : vector<8x128xbf16>, vector<128x128xbf16>, vector<8x128xf32> -> vector<8x128xf32>
    %c0_19 = arith.constant 0 : index
    %c0_20 = arith.constant 0 : index
    %28 = vector.load %arg9[%c0_19, %c0_20] : memref<1x128xf32, #tpu.memory_space<vmem>>, vector<1x128xf32>
    %29 = vector.broadcast %28 : vector<1x128xf32> to vector<8x128xf32>
    %30 = arith.addf %27, %29 : vector<8x128xf32>
    %c0_21 = arith.constant 0 : index
    %c0_22 = arith.constant 0 : index
    %31 = vector.load %arg10[%c0_21, %c0_22] : memref<1x128xf32, #tpu.memory_space<vmem>>, vector<1x128xf32>
    %c0_23 = arith.constant 0 : index
    %c0_24 = arith.constant 0 : index
    %32 = vector.load %arg11[%c0_23, %c0_24] : memref<1x128xf32, #tpu.memory_space<vmem>>, vector<1x128xf32>
    %33 = vector.broadcast %31 : vector<1x128xf32> to vector<8x128xf32>
    %34 = arith.maximumf %33, %30 : vector<8x128xf32>
    %35 = vector.broadcast %32 : vector<1x128xf32> to vector<8x128xf32>
    %36 = arith.minimumf %35, %34 : vector<8x128xf32>
    %c0_25 = arith.constant 0 : index
    %c0_26 = arith.constant 0 : index
    %37 = vector.load %arg12[%c0_25, %c0_26] : memref<8x128xf32, #tpu.memory_space<vmem>>, vector<8x128xf32>
    tpu.vector_store %arg12[%c0_25, %c0_26], %36 {strides = array<i32>} : memref<8x128xf32, #tpu.memory_space<vmem>>, vector<8x128xf32>,
    return
  }
  func.func @transform_0(%arg0: i32) -> (i32, i32) {
    %c0_i32 = arith.constant 0 : i32
    %c0_i32_0 = arith.constant 0 : i32
    return %arg0, %c0_i32 : i32, i32
  }
  func.func @transform_1(%arg0: i32) -> (i32, i32) {
    %c0_i32 = arith.constant 0 : i32
    %c0_i32_0 = arith.constant 0 : i32
    %c0_i32_1 = arith.constant 0 : i32
    return %c0_i32, %c0_i32_0 : i32, i32
  }
  func.func @transform_2(%arg0: i32) -> (i32, i32) {
    %c0_i32 = arith.constant 0 : i32
    %c0_i32_0 = arith.constant 0 : i32
    %c0_i32_1 = arith.constant 0 : i32
    return %c0_i32, %c0_i32_0 : i32, i32
  }
  func.func @transform_3(%arg0: i32) -> (i32, i32) {
    %c0_i32 = arith.constant 0 : i32
    %c0_i32_0 = arith.constant 0 : i32
    %c0_i32_1 = arith.constant 0 : i32
    return %c0_i32, %c0_i32_0 : i32, i32
  }
  func.func @transform_4(%arg0: i32) -> (i32, i32) {
    %c0_i32 = arith.constant 0 : i32
    %c0_i32_0 = arith.constant 0 : i32
    %c0_i32_1 = arith.constant 0 : i32
    return %c0_i32, %c0_i32_0 : i32, i32
  }
  func.func @transform_5(%arg0: i32) -> (i32, i32) {
    %c0_i32 = arith.constant 0 : i32
    %c0_i32_0 = arith.constant 0 : i32
    %c0_i32_1 = arith.constant 0 : i32
    return %c0_i32, %c0_i32_0 : i32, i32
  }
  func.func @transform_6(%arg0: i32) -> (i32, i32) {
    %c0_i32 = arith.constant 0 : i32
    %c0_i32_0 = arith.constant 0 : i32
    %c0_i32_1 = arith.constant 0 : i32
    return %c0_i32, %c0_i32_0 : i32, i32
  }
  func.func @transform_7(%arg0: i32) -> (i32, i32) {
    %c0_i32 = arith.constant 0 : i32
    %c0_i32_0 = arith.constant 0 : i32
    %c0_i32_1 = arith.constant 0 : i32
    return %c0_i32, %c0_i32_0 : i32, i32
  }
  func.func @transform_8(%arg0: i32) -> (i32, i32) {
    %c0_i32 = arith.constant 0 : i32
    %c0_i32_0 = arith.constant 0 : i32
    %c0_i32_1 = arith.constant 0 : i32
    return %c0_i32, %c0_i32_0 : i32, i32
  }
  func.func @transform_9(%arg0: i32) -> (i32, i32) {
    %c0_i32 = arith.constant 0 : i32
    %c0_i32_0 = arith.constant 0 : i32
    %c0_i32_1 = arith.constant 0 : i32
    return %c0_i32, %c0_i32_0 : i32, i32
  }
  func.func @transform_10(%arg0: i32) -> (i32, i32) {
    %c0_i32 = arith.constant 0 : i32
    %c0_i32_0 = arith.constant 0 : i32
    %c0_i32_1 = arith.constant 0 : i32
    return %c0_i32, %c0_i32_0 : i32, i32
  }
  func.func @transform_11(%arg0: i32) -> (i32, i32) {
    %c0_i32 = arith.constant 0 : i32
    %c0_i32_0 = arith.constant 0 : i32
    return %arg0, %c0_i32 : i32, i32
  }
}

</mosaic_0001>

<llo_original>
// kernel: policy_forward.1
$region0: #{policy_forward.1}
  #allocation0 [shape = 'u32[]', space=smem, size = 0x4, offset = 0x4, fixed_abs, tag = 'smem constant byte address 0x4 - core index']
  #allocation1 [shape = 'u32[72,128]{1,0:T(1,128)}', space=vmem, size = 0x9000, scoped, tag = 'internal scratch']
  %s0 = inlined_call_operand.vmem [shape: f32[8,32], index: 0, kind: input, shape index: {}]
  %s1 = inlined_call_operand.vmem [shape: f32[1,32], index: 1, kind: input, shape index: {}]
  %s2 = inlined_call_operand.vmem [shape: f32[1,32], index: 2, kind: input, shape index: {}]
  %s3 = inlined_call_operand.vmem [shape: bf16[32,128], index: 3, kind: input, shape index: {}]
  %s4 = inlined_call_operand.vmem [shape: f32[1,128], index: 4, kind: input, shape index: {}]
  %s5 = inlined_call_operand.vmem [shape: bf16[128,128], index: 5, kind: input, shape index: {}]
  %s6 = inlined_call_operand.vmem [shape: f32[1,128], index: 6, kind: input, shape index: {}]
  %s7 = inlined_call_operand.vmem [shape: bf16[128,128], index: 7, kind: input, shape index: {}]
  %s8 = inlined_call_operand.vmem [shape: f32[1,128], index: 8, kind: input, shape index: {}]
  %s9 = inlined_call_operand.vmem [shape: f32[1,128], index: 9, kind: input, shape index: {}]
  %s10 = inlined_call_operand.vmem [shape: f32[1,128], index: 10, kind: input, shape index: {}]
  %s11 = inlined_call_operand.hbm [shape: f32[8,128], index: 11, kind: output, shape index: {}]
  %s12 = sld [smem:[#allocation0]]
  $region54: #{policy_forward.1} parent=0
    _
  %s14 = ssub.s32 1, %s12
  %s15 = scalar_select 0, %s14, %s12
  $region1: #{policy_forward.1} parent=0
    #allocation2 [shape = 'u8[4096]{0}', space=vmem, size = 0x1000, scoped, tag = 'output window, operand 0, single buffered']
    #allocation3 [shape = 's32[1]{0}', space=sflag, size = 0x4, scoped, tag = 'scoped memory for policy_forward.1']
    %16 = vsyncpa [#allocation3], 0
    // Predicated region
    $region2: #{policy_forward.1} parent=1 // pred_check
      _
    $region3: #{policy_forward.1} parent=1 // pred_check_branch
      %18 = sbr.rel (0) target = $region5
    $region4: #{policy_forward.1} parent=1 // pred_region
      _
    $region5: #{policy_forward.1} parent=1 // pred_fallthru
      _
    // Predicated region
    $region6: #{policy_forward.1} parent=1 // pred_check
      _
    $region7: #{policy_forward.1} parent=1 // pred_check_branch
      %20 = sbr.rel (0) target = $region9
    $region8: #{policy_forward.1} parent=1 // pred_region
      _
    $region9: #{policy_forward.1} parent=1 // pred_fallthru
      _
    // Predicated region
    $region10: #{policy_forward.1} parent=1 // pred_check
      _
    $region11: #{policy_forward.1} parent=1 // pred_check_branch
      %22 = sbr.rel (0) target = $region13
    $region12: #{policy_forward.1} parent=1 // pred_region
      _
    $region13: #{policy_forward.1} parent=1 // pred_fallthru
      _
    // Predicated region
    $region14: #{policy_forward.1} parent=1 // pred_check
      _
    $region15: #{policy_forward.1} parent=1 // pred_check_branch
      %24 = sbr.rel (0) target = $region17
    $region16: #{policy_forward.1} parent=1 // pred_region
      _
    $region17: #{policy_forward.1} parent=1 // pred_fallthru
      _
    // Predicated region
    $region18: #{policy_forward.1} parent=1 // pred_check
      _
    $region19: #{policy_forward.1} parent=1 // pred_check_branch
      %26 = sbr.rel (0) target = $region21
    $region20: #{policy_forward.1} parent=1 // pred_region
      _
    $region21: #{policy_forward.1} parent=1 // pred_fallthru
      _
    // Predicated region
    $region22: #{policy_forward.1} parent=1 // pred_check
      _
    $region23: #{policy_forward.1} parent=1 // pred_check_branch
      %28 = sbr.rel (0) target = $region25
    $region24: #{policy_forward.1} parent=1 // pred_region
      _
    $region25: #{policy_forward.1} parent=1 // pred_fallthru
      _
    // Predicated region
    $region26: #{policy_forward.1} parent=1 // pred_check
      _
    $region27: #{policy_forward.1} parent=1 // pred_check_branch
      %30 = sbr.rel (0) target = $region29
    $region28: #{policy_forward.1} parent=1 // pred_region
      _
    $region29: #{policy_forward.1} parent=1 // pred_fallthru
      _
    // Predicated region
    $region30: #{policy_forward.1} parent=1 // pred_check
      _
    $region31: #{policy_forward.1} parent=1 // pred_check_branch
      %32 = sbr.rel (0) target = $region33
    $region32: #{policy_forward.1} parent=1 // pred_region
      _
    $region33: #{policy_forward.1} parent=1 // pred_fallthru
      _
    // Predicated region
    $region34: #{policy_forward.1} parent=1 // pred_check
      _
    $region35: #{policy_forward.1} parent=1 // pred_check_branch
      %34 = sbr.rel (0) target = $region37
    $region36: #{policy_forward.1} parent=1 // pred_region
      _
    $region37: #{policy_forward.1} parent=1 // pred_fallthru
      _
    // Predicated region
    $region38: #{policy_forward.1} parent=1 // pred_check
      _
    $region39: #{policy_forward.1} parent=1 // pred_check_branch
      %36 = sbr.rel (0) target = $region41
    $region40: #{policy_forward.1} parent=1 // pred_region
      _
    $region41: #{policy_forward.1} parent=1 // pred_fallthru
      _
    // Predicated region
    $region42: #{policy_forward.1} parent=1 // pred_check
      _
    $region43: #{policy_forward.1} parent=1 // pred_check_branch
      %38 = sbr.rel (0) target = $region45
    $region44: #{policy_forward.1} parent=1 // pred_region
      _
    $region45: #{policy_forward.1} parent=1 // pred_fallthru
      _
    %v40 = vld [vmem:[%s0] sm:$0xff]
    %v41 = vld [vmem:[%s1] sm:$0x1]
    %v43 = vperm.slane %v41, 0
    %v45 = vsub.f32 %v40, %v43
    %v46 = vld [vmem:[%s2] sm:$0x1]
    %v48 = vperm.slane %v46, 0
    %v50 = vmul.f32 %v45, %v48
    %v51 = vmax.f32 %v50, -10.0
    %v52 = vmin.f32 %v51, 10.0
    %v53 = vpack.c.bf16 %v52, %v52
    %v54 = vld [vmem:[%s3] sm:$0xf]
    %v55 = vld [vmem:[%s3 + $0x4] sm:$0xf]
    %v56 = vld [vmem:[%s3 + $0x8] sm:$0xf]
    %v57 = vld [vmem:[%s3 + $0xc] sm:$0xf]
    %v58 = vld [vmem:[%s4] sm:$0x1]
    %v60 = vperm.slane %v58, 0
    %v66 = vunpack.c.l.b16 %v54
    %v67 = vunpack.c.l.b16 %v55
    %v68 = vunpack.c.l.b16 %v56
    %v69 = vunpack.c.l.b16 %v57
    %v70 = vpack.c.b16 %v67, %v66
    %v71 = vpack.c.b16 %v69, %v68
    %vm74 = vcmask 261120
    %v76 = vsel %vm74, %v53, 0
    %78 = vmatpush.bf16.msra.mxu0 0
    %79 = vmatpush.bf16.msra.mxu0 0
    %80 = vmatpush.bf16.msra.mxu0 0
    %81 = vmatpush.bf16.msra.mxu0 0
    %82 = vmatpush.bf16.msra.mxu0 0
    %83 = vmatpush.bf16.msra.mxu0 0
    %84 = vmatpush.bf16.msra.mxu0 %v71
    %85 = vmatpush.bf16.msra.mxu0 %v70
    %86 = vmatmul.bf16.gmra.mxu0 %v76
    %v87 = vpop.f32.mrf.mxu0
    %v88 = vadd.f32 %v60, %v87
    %v89 = vpop.f32.mrf.mxu0
    %90 = vdwg.mxu0
    %v91 = vtanh.pop %v88
    %v92 = vpack.c.bf16 %v91, %v91
    %v93 = vld [vmem:[%s5] sm:$0xf]
    %v94 = vld [vmem:[%s5 + $0x4] sm:$0xf]
    %v95 = vld [vmem:[%s5 + $0x8] sm:$0xf]
    %v96 = vld [vmem:[%s5 + $0xc] sm:$0xf]
    %v97 = vld [vmem:[%s5 + $0x10] sm:$0xf]
    %v98 = vld [vmem:[%s5 + $0x14] sm:$0xf]
    %v99 = vld [vmem:[%s5 + $0x18] sm:$0xf]
    %v100 = vld [vmem:[%s5 + $0x1c] sm:$0xf]
    %v101 = vld [vmem:[%s5 + $0x20] sm:$0xf]
    %v102 = vld [vmem:[%s5 + $0x24] sm:$0xf]
    %v103 = vld [vmem:[%s5 + $0x28] sm:$0xf]
    %v104 = vld [vmem:[%s5 + $0x2c] sm:$0xf]
    %v105 = vld [vmem:[%s5 + $0x30] sm:$0xf]
    %v106 = vld [vmem:[%s5 + $0x34] sm:$0xf]
    %v107 = vld [vmem:[%s5 + $0x38] sm:$0xf]
    %v108 = vld [vmem:[%s5 + $0x3c] sm:$0xf]
    %v109 = vld [vmem:[%s6] sm:$0x1]
    %v111 = vperm.slane %v109, 0
    %v129 = vunpack.c.l.b16 %v93
    %v130 = vunpack.c.l.b16 %v94
    %v131 = vunpack.c.l.b16 %v95
    %v132 = vunpack.c.l.b16 %v96
    %v133 = vunpack.c.l.b16 %v97
    %v134 = vunpack.c.l.b16 %v98
    %v135 = vunpack.c.l.b16 %v99
    %v136 = vunpack.c.l.b16 %v100
    %v137 = vunpack.c.l.b16 %v101
    %v138 = vunpack.c.l.b16 %v102
    %v139 = vunpack.c.l.b16 %v103
    %v140 = vunpack.c.l.b16 %v104
    %v141 = vunpack.c.l.b16 %v105
    %v142 = vunpack.c.l.b16 %v106
    %v143 = vunpack.c.l.b16 %v107
    %v144 = vunpack.c.l.b16 %v108
    %v145 = vpack.c.b16 %v130, %v129
    %v146 = vpack.c.b16 %v132, %v131
    %v147 = vpack.c.b16 %v134, %v133
    %v148 = vpack.c.b16 %v136, %v135
    %v149 = vpack.c.b16 %v138, %v137
    %v150 = vpack.c.b16 %v140, %v139
    %v151 = vpack.c.b16 %v142, %v141
    %v152 = vpack.c.b16 %v144, %v143
    %161 = vmatpush.bf16.msra.mxu0 %v152
    %162 = vmatpush.bf16.msra.mxu0 %v151
    %163 = vmatpush.bf16.msra.mxu0 %v150
    %164 = vmatpush.bf16.msra.mxu0 %v149
    %165 = vmatpush.bf16.msra.mxu0 %v148
    %166 = vmatpush.bf16.msra.mxu0 %v147
    %167 = vmatpush.bf16.msra.mxu0 %v146
    %168 = vmatpush.bf16.msra.mxu0 %v145
    %169 = vmatmul.bf16.gmra.mxu0 %v92
    %v170 = vpop.f32.mrf.mxu0
    %v171 = vadd.f32 %v111, %v170
    %v172 = vpop.f32.mrf.mxu0
    %173 = vdwg.mxu0
    %v174 = vtanh.pop %v171
    %v175 = vpack.c.bf16 %v174, %v174
    %v176 = vld [vmem:[%s7] sm:$0xf]
    %v177 = vld [vmem:[%s7 + $0x4] sm:$0xf]
    %v178 = vld [vmem:[%s7 + $0x8] sm:$0xf]
    %v179 = vld [vmem:[%s7 + $0xc] sm:$0xf]
    %v180 = vld [vmem:[%s7 + $0x10] sm:$0xf]
    %v181 = vld [vmem:[%s7 + $0x14] sm:$0xf]
    %v182 = vld [vmem:[%s7 + $0x18] sm:$0xf]
    %v183 = vld [vmem:[%s7 + $0x1c] sm:$0xf]
    %v184 = vld [vmem:[%s7 + $0x20] sm:$0xf]
    %v185 = vld [vmem:[%s7 + $0x24] sm:$0xf]
    %v186 = vld [vmem:[%s7 + $0x28] sm:$0xf]
    %v187 = vld [vmem:[%s7 + $0x2c] sm:$0xf]
    %v188 = vld [vmem:[%s7 + $0x30] sm:$0xf]
    %v189 = vld [vmem:[%s7 + $0x34] sm:$0xf]
    %v190 = vld [vmem:[%s7 + $0x38] sm:$0xf]
    %v191 = vld [vmem:[%s7 + $0x3c] sm:$0xf]
    %v192 = vld [vmem:[%s8] sm:$0x1]
    %v194 = vperm.slane %v192, 0
    %v212 = vunpack.c.l.b16 %v176
    %v213 = vunpack.c.l.b16 %v177
    %v214 = vunpack.c.l.b16 %v178
    %v215 = vunpack.c.l.b16 %v179
    %v216 = vunpack.c.l.b16 %v180
    %v217 = vunpack.c.l.b16 %v181
    %v218 = vunpack.c.l.b16 %v182
    %v219 = vunpack.c.l.b16 %v183
    %v220 = vunpack.c.l.b16 %v184
    %v221 = vunpack.c.l.b16 %v185
    %v222 = vunpack.c.l.b16 %v186
    %v223 = vunpack.c.l.b16 %v187
    %v224 = vunpack.c.l.b16 %v188
    %v225 = vunpack.c.l.b16 %v189
    %v226 = vunpack.c.l.b16 %v190
    %v227 = vunpack.c.l.b16 %v191
    %v228 = vpack.c.b16 %v213, %v212
    %v229 = vpack.c.b16 %v215, %v214
    %v230 = vpack.c.b16 %v217, %v216
    %v231 = vpack.c.b16 %v219, %v218
    %v232 = vpack.c.b16 %v221, %v220
    %v233 = vpack.c.b16 %v223, %v222
    %v234 = vpack.c.b16 %v225, %v224
    %v235 = vpack.c.b16 %v227, %v226
    %244 = vmatpush.bf16.msra.mxu0 %v235
    %245 = vmatpush.bf16.msra.mxu0 %v234
    %246 = vmatpush.bf16.msra.mxu0 %v233
    %247 = vmatpush.bf16.msra.mxu0 %v232
    %248 = vmatpush.bf16.msra.mxu0 %v231
    %249 = vmatpush.bf16.msra.mxu0 %v230
    %250 = vmatpush.bf16.msra.mxu0 %v229
    %251 = vmatpush.bf16.msra.mxu0 %v228
    %252 = vmatmul.bf16.gmra.mxu0 %v175
    %v253 = vpop.f32.mrf.mxu0
    %v254 = vadd.f32 %v194, %v253
    %v255 = vpop.f32.mrf.mxu0
    %256 = vdwg.mxu0
    %v257 = vld [vmem:[%s9] sm:$0x1]
    %v258 = vld [vmem:[%s10] sm:$0x1]
    %v260 = vperm.slane %v257, 0
    %v262 = vmax.f32 %v260, %v254
    %v264 = vperm.slane %v258, 0
    %v266 = vmin.f32 %v264, %v262
    %267 = vst [vmem:[#allocation2] sm:$0xff] %v266
    // Predicated region
    $region46: #{policy_forward.1} parent=1 // pred_check
      _
    $region47: #{policy_forward.1} parent=1 // pred_check_branch
      %269 = sbr.rel (0) target = $region49
    $region48: #{policy_forward.1} parent=1 // pred_region
      %271 = vsyncadd [#allocation3], 0
      %s273 = sshll.u32 [#allocation2], 4
      %s274 = int_to_ptr.vmem [resolvable:$true] %s273
      %s275 = sshll.u32 %s11, 4
      %s276 = int_to_ptr.hbm [resolvable:$true] %s275
      %278 = dma.vmem_to_hbm [thread:$0]  %s274, 128, %s276, [#allocation3]
    $region49: #{policy_forward.1} parent=1 // pred_fallthru
      _
    // Predicated region
    $region50: #{policy_forward.1} parent=1 // pred_check
      _
    $region51: #{policy_forward.1} parent=1 // pred_check_branch
      %280 = sbr.rel (0) target = $region53
    $region52: #{policy_forward.1} parent=1 // pred_region
      %282 = dma.done [#allocation3], 128
    $region53: #{policy_forward.1} parent=1 // pred_fallthru
      _
    %283 = vsyncpa [#allocation3], 1

</llo_original>
